<compile_context>
chip_gen: v5e
topology: v5e:2x2
jax: 0.10.0
libtpu: 0.0.40
codegen_flags: <defaults>
</compile_context>

<pallas_src>
from functools import partial

import jax
import jax.numpy as jnp
from jax import lax
from jax.experimental import pallas as pl
from jax.experimental.pallas import tpu as pltpu


def bilstm_kernel(x2_ref, wih_ref, whh_ref, b_ref, wfc_ref, bfc_ref, out_ref,
                  *, T, Bp, H):
    """Fused bidirectional LSTM + final linear.

    x2_ref : (T*Bp, 2E)  rows t*Bp..(t+1)*Bp hold [emb[t] | emb[T-1-t]]
    wih_ref: (2E, 8H)    combined input weights, gate cols [i_f,i_b,f_f,f_b,o_f,o_b,g_f,g_b]
    whh_ref: (2H, 8H)    block-diagonal recurrent weights, same column order
    b_ref  : (1, 8H)     combined bias (b_ih + b_hh), same column order
    wfc_ref: (2H, Cp)    final linear weight (classes padded to Cp lanes)
    bfc_ref: (1, Cp)
    out_ref: (Bp, Cp)
    """
    H2 = 2 * H

    whh = whh_ref[...]                                   # keep resident

    # ---- hoisted input projection: one MXU-filling matmul for all T steps
    #      and both directions ----
    gx = (jnp.dot(x2_ref[...], wih_ref[...], preferred_element_type=jnp.float32)
          + b_ref[...])                                  # (T*Bp, 8H)

    h = jnp.zeros((Bp, H2), jnp.float32)                 # [h_fwd | h_bwd]
    c = jnp.zeros((Bp, H2), jnp.float32)                 # [c_fwd | c_bwd]

    # ---- fused + fully-unrolled recurrence (T is small & static) ----
    # Step t: forward direction consumes time t, backward direction consumes
    # time T-1-t (its reversed inputs are baked into gx), so both serial
    # chains advance in the same iteration.
    for t in range(T):
        g = (gx[t * Bp:(t + 1) * Bp, :]
             + jnp.dot(h, whh, preferred_element_type=jnp.float32))   # (Bp, 8H)
        sg = jax.nn.sigmoid(g[:, :3 * H2])     # [i_f,i_b | f_f,f_b | o_f,o_b]
        gg = jnp.tanh(g[:, 3 * H2:])           # [g_f, g_b]
        i_gate = sg[:, 0 * H2:1 * H2]
        f_gate = sg[:, 1 * H2:2 * H2]
        o_gate = sg[:, 2 * H2:3 * H2]
        c = f_gate * c + i_gate * gg
        h = o_gate * jnp.tanh(c)

    # h == concat(fwd hidden at t=T-1, bwd hidden at t=0) == module's last_hidden
    out_ref[...] = (jnp.dot(h, wfc_ref[...], preferred_element_type=jnp.float32)
                    + bfc_ref[...]).astype(out_ref.dtype)


def simple_bilstm(x_tokens, params, *, H, C):
    """Full forward pass; returns (B, C) logits."""
    B, T = x_tokens.shape
    E = params["embedding"].shape[1]
    Bp = ((B + 7) // 8) * 8          # pad batch to a full sublane tile
    Cp = ((C + 127) // 128) * 128    # pad classes lane-dense

    # Embedding gather stays in JAX (glue); layout prep (time-major, padding,
    # time-reversed copy for the backward direction) is zero-FLOP glue too.
    emb = params["embedding"][x_tokens].astype(jnp.float32)      # (B, T, E)
    emb = jnp.transpose(emb, (1, 0, 2))                          # (T, B, E)
    emb = jnp.pad(emb, ((0, 0), (0, Bp - B), (0, 0)))            # (T, Bp, E)
    x2 = jnp.concatenate([emb, emb[::-1]], axis=-1)              # (T, Bp, 2E)
    x2 = x2.reshape(T * Bp, 2 * E)

    # ---- weight re-layout: interleaved gate columns [i_f,i_b,f_f,f_b,o_f,o_b,g_f,g_b]
    # PyTorch gate order in the packed weights is [i, f, g, o].
    def gate_cols(w):                 # w: (4H, in) -> (in, H) blocks i, f, o, g
        wT = w.T
        return (wT[:, 0:H], wT[:, H:2 * H], wT[:, 3 * H:4 * H], wT[:, 2 * H:3 * H])

    xi_f, xf_f, xo_f, xg_f = gate_cols(params["w_ih_f"])         # (E, H) each
    xi_b, xf_b, xo_b, xg_b = gate_cols(params["w_ih_b"])
    ri_f, rf_f, ro_f, rg_f = gate_cols(params["w_hh_f"])         # (H, H) each
    ri_b, rf_b, ro_b, rg_b = gate_cols(params["w_hh_b"])

    Ze = jnp.zeros((E, H), jnp.float32)
    Zh = jnp.zeros((H, H), jnp.float32)
    wih = jnp.concatenate([
        jnp.concatenate([xi_f, Ze, xf_f, Ze, xo_f, Ze, xg_f, Ze], axis=1),
        jnp.concatenate([Ze, xi_b, Ze, xf_b, Ze, xo_b, Ze, xg_b], axis=1)],
        axis=0)                                                  # (2E, 8H)
    whh = jnp.concatenate([
        jnp.concatenate([ri_f, Zh, rf_f, Zh, ro_f, Zh, rg_f, Zh], axis=1),
        jnp.concatenate([Zh, ri_b, Zh, rf_b, Zh, ro_b, Zh, rg_b], axis=1)],
        axis=0)                                                  # (2H, 8H) block-diagonal

    def gate_bias(b):
        return b[0:H], b[H:2 * H], b[3 * H:4 * H], b[2 * H:3 * H]

    b_f = params["b_ih_f"] + params["b_hh_f"]
    b_b = params["b_ih_b"] + params["b_hh_b"]
    bi_f, bf_f, bo_f, bg_f = gate_bias(b_f)
    bi_b, bf_b, bo_b, bg_b = gate_bias(b_b)
    bias = jnp.concatenate(
        [bi_f, bi_b, bf_f, bf_b, bo_f, bo_b, bg_f, bg_b]).reshape(1, 8 * H)

    wfc = jnp.pad(params["fc_w"].T, ((0, 0), (0, Cp - C)))       # (2H, Cp)
    bfc = jnp.pad(params["fc_b"], (0, Cp - C)).reshape(1, Cp)    # (1, Cp)

    vmem = pl.BlockSpec(memory_space=pltpu.MemorySpace.VMEM)
    out = pl.pallas_call(
        partial(bilstm_kernel, T=T, Bp=Bp, H=H),
        out_shape=jax.ShapeDtypeStruct((Bp, Cp), jnp.float32),
        in_specs=[vmem] * 6,
        out_specs=vmem,
        # TODO(synk): at production sizes on v7x, add an explicit
        # vmem_limit_bytes and a batch-parallel grid across the two TCs.
    )(x2, wih, whh, bias, wfc, bfc)
    return out[:B, :C]


def reference_forward(x_tokens, params, *, H, C):
    """Pure-JAX reference mirroring the PyTorch SimpleBILSTM semantics."""
    emb = params["embedding"][x_tokens].astype(jnp.float32)      # (B, T, E)
    B, T, E = emb.shape
    emb_t = jnp.transpose(emb, (1, 0, 2))                        # (T, B, E)

    def run_dir(seq, wih, whh, b):
        def step(carry, x_t):
            h, c = carry
            gates = x_t @ wih.T + h @ whh.T + b
            i = jax.nn.sigmoid(gates[:, :H])
            f = jax.nn.sigmoid(gates[:, H:2 * H])
            g = jnp.tanh(gates[:, 2 * H:3 * H])
            o = jax.nn.sigmoid(gates[:, 3 * H:])
            c = f * c + i * g
            h = o * jnp.tanh(c)
            return (h, c), h
        init = (jnp.zeros((B, H), jnp.float32), jnp.zeros((B, H), jnp.float32))
        _, hs = lax.scan(step, init, seq)
        return hs                                                # (T, B, H)

    hf = run_dir(emb_t, params["w_ih_f"], params["w_hh_f"],
                 params["b_ih_f"] + params["b_hh_f"])
    hb = run_dir(emb_t[::-1], params["w_ih_b"], params["w_hh_b"],
                 params["b_ih_b"] + params["b_hh_b"])[::-1]
    # lstm_out[:, -1, :H] == hf[-1];  lstm_out[:, 0, H:] == hb[0]
    last_hidden = jnp.concatenate([hf[-1], hb[0]], axis=-1)      # (B, 2H)
    return last_hidden @ params["fc_w"].T + params["fc_b"]


def make_params(key, *, vocab, E, H, C):
    ks = jax.random.split(key, 11)
    n = lambda k, shape, s=0.1: (s * jax.random.normal(k, shape)).astype(jnp.float32)
    return {
        "embedding": n(ks[0], (vocab, E), 1.0),
        "w_ih_f": n(ks[1], (4 * H, E)), "w_hh_f": n(ks[2], (4 * H, H)),
        "b_ih_f": n(ks[3], (4 * H,)),   "b_hh_f": n(ks[4], (4 * H,)),
        "w_ih_b": n(ks[5], (4 * H, E)), "w_hh_b": n(ks[6], (4 * H, H)),
        "b_ih_b": n(ks[7], (4 * H,)),   "b_hh_b": n(ks[8], (4 * H,)),
        "fc_w": n(ks[9], (C, 2 * H)),   "fc_b": n(ks[10], (C,)),
    }


if __name__ == "__main__":
    # Small config consistent with the module: vocab=100, E=32, H=32, classes=5
    VOCAB, E, H, C = 100, 32, 32, 5
    B, T = 2, 8

    key = jax.random.PRNGKey(0)
    k_params, k_tokens = jax.random.split(key)
    params = make_params(k_params, vocab=VOCAB, E=E, H=H, C=C)
    x_tokens = jax.random.randint(k_tokens, (B, T), 0, VOCAB, dtype=jnp.int32)

    out = simple_bilstm(x_tokens, params, H=H, C=C)
    out = jax.block_until_ready(out)

    ref = jax.block_until_ready(reference_forward(x_tokens, params, H=H, C=C))
    assert out.shape == (B, C)
    assert jnp.allclose(out, ref, atol=2e-3, rtol=2e-3), (out, ref)

    print("KERNEL_OK")
</pallas_src>

<mosaic_0001>
module attributes {stable_mosaic.version = 11 : i64} {
  func.func @bilstm_kernel(%arg0: memref<64x64xf32, #tpu.memory_space<vmem>>, %arg1: memref<64x256xf32, #tpu.memory_space<vmem>>, %arg2: memref<64x256xf32, #tpu.memory_space<vmem>>, %arg3: memref<1x256xf32, #tpu.memory_space<vmem>>, %arg4: memref<64x128xf32, #tpu.memory_space<vmem>>, %arg5: memref<1x128xf32, #tpu.memory_space<vmem>>, %arg6: memref<8x128xf32, #tpu.memory_space<vmem>>) attributes {dimension_semantics = [], scalar_prefetch = 0 : i64, scratch_operands = 0 : i64, tpu.core_type = #tpu.core_type<tc>} {
    %c0 = arith.constant 0 : index
    %c0_0 = arith.constant 0 : index
    %0 = vector.load %arg2[%c0, %c0_0] : memref<64x256xf32, #tpu.memory_space<vmem>>, vector<64x256xf32>
    %c0_1 = arith.constant 0 : index
    %c0_2 = arith.constant 0 : index
    %1 = vector.load %arg0[%c0_1, %c0_2] : memref<64x64xf32, #tpu.memory_space<vmem>>, vector<64x64xf32>
    %c0_3 = arith.constant 0 : index
    %c0_4 = arith.constant 0 : index
    %2 = vector.load %arg1[%c0_3, %c0_4] : memref<64x256xf32, #tpu.memory_space<vmem>>, vector<64x256xf32>
    %cst = arith.constant dense<0.000000e+00> : vector<64x256xf32>
    %3 = tpu.matmul %1, %2, %cst {dimension_numbers = #tpu.dot_dimension_numbers<[1], [0], [0], [1], [0, 0, 1, 1], [], []>} : vector<64x64xf32>, vector<64x256xf32>, vector<64x256xf32> -> vector<64x256xf32>
    %c0_5 = arith.constant 0 : index
    %c0_6 = arith.constant 0 : index
    %4 = vector.load %arg3[%c0_5, %c0_6] : memref<1x256xf32, #tpu.memory_space<vmem>>, vector<1x256xf32>
    %5 = vector.broadcast %4 : vector<1x256xf32> to vector<64x256xf32>
    %6 = arith.addf %3, %5 : vector<64x256xf32>
    %cst_7 = arith.constant 0.000000e+00 : f32
    %7 = vector.broadcast %cst_7 : f32 to vector<8x64xf32>
    %cst_8 = arith.constant 0.000000e+00 : f32
    %8 = vector.broadcast %cst_8 : f32 to vector<8x64xf32>
    %9 = vector.extract_strided_slice %6 {offsets = [0, 0], sizes = [8, 256], strides = [1, 1]} : vector<64x256xf32> to vector<8x256xf32>
    %cst_9 = arith.constant dense<0.000000e+00> : vector<8x256xf32>
    %10 = tpu.matmul %7, %0, %cst_9 {dimension_numbers = #tpu.dot_dimension_numbers<[1], [0], [0], [1], [0, 0, 1, 1], [], []>} : vector<8x64xf32>, vector<64x256xf32>, vector<8x256xf32> -> vector<8x256xf32>
    %11 = arith.addf %9, %10 : vector<8x256xf32>
    %12 = vector.extract_strided_slice %11 {offsets = [0, 0], sizes = [8, 192], strides = [1, 1]} : vector<8x256xf32> to vector<8x192xf32>
    %13 = arith.negf %12 : vector<8x192xf32>
    %14 = math.exp %13 : vector<8x192xf32>
    %cst_10 = arith.constant 1.000000e+00 : f32
    %15 = vector.broadcast %cst_10 : f32 to vector<8x192xf32>
    %16 = arith.addf %15, %14 : vector<8x192xf32>
    %17 = arith.divf %15, %16 : vector<8x192xf32>
    %18 = vector.extract_strided_slice %11 {offsets = [0, 192], sizes = [8, 64], strides = [1, 1]} : vector<8x256xf32> to vector<8x64xf32>
    %19 = math.tanh %18 : vector<8x64xf32>
    %20 = vector.extract_strided_slice %17 {offsets = [0, 0], sizes = [8, 64], strides = [1, 1]} : vector<8x192xf32> to vector<8x64xf32>
    %21 = vector.extract_strided_slice %17 {offsets = [0, 64], sizes = [8, 64], strides = [1, 1]} : vector<8x192xf32> to vector<8x64xf32>
    %22 = vector.extract_strided_slice %17 {offsets = [0, 128], sizes = [8, 64], strides = [1, 1]} : vector<8x192xf32> to vector<8x64xf32>
    %23 = arith.mulf %21, %8 : vector<8x64xf32>
    %24 = arith.mulf %20, %19 : vector<8x64xf32>
    %25 = arith.addf %23, %24 : vector<8x64xf32>
    %26 = math.tanh %25 : vector<8x64xf32>
    %27 = arith.mulf %22, %26 : vector<8x64xf32>
    %28 = vector.extract_strided_slice %6 {offsets = [8, 0], sizes = [8, 256], strides = [1, 1]} : vector<64x256xf32> to vector<8x256xf32>
    %cst_11 = arith.constant dense<0.000000e+00> : vector<8x256xf32>
    %29 = tpu.matmul %27, %0, %cst_11 {dimension_numbers = #tpu.dot_dimension_numbers<[1], [0], [0], [1], [0, 0, 1, 1], [], []>} : vector<8x64xf32>, vector<64x256xf32>, vector<8x256xf32> -> vector<8x256xf32>
    %30 = arith.addf %28, %29 : vector<8x256xf32>
    %31 = vector.extract_strided_slice %30 {offsets = [0, 0], sizes = [8, 192], strides = [1, 1]} : vector<8x256xf32> to vector<8x192xf32>
    %32 = arith.negf %31 : vector<8x192xf32>
    %33 = math.exp %32 : vector<8x192xf32>
    %cst_12 = arith.constant 1.000000e+00 : f32
    %34 = vector.broadcast %cst_12 : f32 to vector<8x192xf32>
    %35 = arith.addf %34, %33 : vector<8x192xf32>
    %36 = arith.divf %34, %35 : vector<8x192xf32>
    %37 = vector.extract_strided_slice %30 {offsets = [0, 192], sizes = [8, 64], strides = [1, 1]} : vector<8x256xf32> to vector<8x64xf32>
    %38 = math.tanh %37 : vector<8x64xf32>
    %39 = vector.extract_strided_slice %36 {offsets = [0, 0], sizes = [8, 64], strides = [1, 1]} : vector<8x192xf32> to vector<8x64xf32>
    %40 = vector.extract_strided_slice %36 {offsets = [0, 64], sizes = [8, 64], strides = [1, 1]} : vector<8x192xf32> to vector<8x64xf32>
    %41 = vector.extract_strided_slice %36 {offsets = [0, 128], sizes = [8, 64], strides = [1, 1]} : vector<8x192xf32> to vector<8x64xf32>
    %42 = arith.mulf %40, %25 : vector<8x64xf32>
    %43 = arith.mulf %39, %38 : vector<8x64xf32>
    %44 = arith.addf %42, %43 : vector<8x64xf32>
    %45 = math.tanh %44 : vector<8x64xf32>
    %46 = arith.mulf %41, %45 : vector<8x64xf32>
    %47 = vector.extract_strided_slice %6 {offsets = [16, 0], sizes = [8, 256], strides = [1, 1]} : vector<64x256xf32> to vector<8x256xf32>
    %cst_13 = arith.constant dense<0.000000e+00> : vector<8x256xf32>
    %48 = tpu.matmul %46, %0, %cst_13 {dimension_numbers = #tpu.dot_dimension_numbers<[1], [0], [0], [1], [0, 0, 1, 1], [], []>} : vector<8x64xf32>, vector<64x256xf32>, vector<8x256xf32> -> vector<8x256xf32>
    %49 = arith.addf %47, %48 : vector<8x256xf32>
    %50 = vector.extract_strided_slice %49 {offsets = [0, 0], sizes = [8, 192], strides = [1, 1]} : vector<8x256xf32> to vector<8x192xf32>
    %51 = arith.negf %50 : vector<8x192xf32>
    %52 = math.exp %51 : vector<8x192xf32>
    %cst_14 = arith.constant 1.000000e+00 : f32
    %53 = vector.broadcast %cst_14 : f32 to vector<8x192xf32>
    %54 = arith.addf %53, %52 : vector<8x192xf32>
    %55 = arith.divf %53, %54 : vector<8x192xf32>
    %56 = vector.extract_strided_slice %49 {offsets = [0, 192], sizes = [8, 64], strides = [1, 1]} : vector<8x256xf32> to vector<8x64xf32>
    %57 = math.tanh %56 : vector<8x64xf32>
    %58 = vector.extract_strided_slice %55 {offsets = [0, 0], sizes = [8, 64], strides = [1, 1]} : vector<8x192xf32> to vector<8x64xf32>
    %59 = vector.extract_strided_slice %55 {offsets = [0, 64], sizes = [8, 64], strides = [1, 1]} : vector<8x192xf32> to vector<8x64xf32>
    %60 = vector.extract_strided_slice %55 {offsets = [0, 128], sizes = [8, 64], strides = [1, 1]} : vector<8x192xf32> to vector<8x64xf32>
    %61 = arith.mulf %59, %44 : vector<8x64xf32>
    %62 = arith.mulf %58, %57 : vector<8x64xf32>
    %63 = arith.addf %61, %62 : vector<8x64xf32>
    %64 = math.tanh %63 : vector<8x64xf32>
    %65 = arith.mulf %60, %64 : vector<8x64xf32>
    %66 = vector.extract_strided_slice %6 {offsets = [24, 0], sizes = [8, 256], strides = [1, 1]} : vector<64x256xf32> to vector<8x256xf32>
    %cst_15 = arith.constant dense<0.000000e+00> : vector<8x256xf32>
    %67 = tpu.matmul %65, %0, %cst_15 {dimension_numbers = #tpu.dot_dimension_numbers<[1], [0], [0], [1], [0, 0, 1, 1], [], []>} : vector<8x64xf32>, vector<64x256xf32>, vector<8x256xf32> -> vector<8x256xf32>
    %68 = arith.addf %66, %67 : vector<8x256xf32>
    %69 = vector.extract_strided_slice %68 {offsets = [0, 0], sizes = [8, 192], strides = [1, 1]} : vector<8x256xf32> to vector<8x192xf32>
    %70 = arith.negf %69 : vector<8x192xf32>
    %71 = math.exp %70 : vector<8x192xf32>
    %cst_16 = arith.constant 1.000000e+00 : f32
    %72 = vector.broadcast %cst_16 : f32 to vector<8x192xf32>
    %73 = arith.addf %72, %71 : vector<8x192xf32>
    %74 = arith.divf %72, %73 : vector<8x192xf32>
    %75 = vector.extract_strided_slice %68 {offsets = [0, 192], sizes = [8, 64], strides = [1, 1]} : vector<8x256xf32> to vector<8x64xf32>
    %76 = math.tanh %75 : vector<8x64xf32>
    %77 = vector.extract_strided_slice %74 {offsets = [0, 0], sizes = [8, 64], strides = [1, 1]} : vector<8x192xf32> to vector<8x64xf32>
    %78 = vector.extract_strided_slice %74 {offsets = [0, 64], sizes = [8, 64], strides = [1, 1]} : vector<8x192xf32> to vector<8x64xf32>
    %79 = vector.extract_strided_slice %74 {offsets = [0, 128], sizes = [8, 64], strides = [1, 1]} : vector<8x192xf32> to vector<8x64xf32>
    %80 = arith.mulf %78, %63 : vector<8x64xf32>
    %81 = arith.mulf %77, %76 : vector<8x64xf32>
    %82 = arith.addf %80, %81 : vector<8x64xf32>
    %83 = math.tanh %82 : vector<8x64xf32>
    %84 = arith.mulf %79, %83 : vector<8x64xf32>
    %85 = vector.extract_strided_slice %6 {offsets = [32, 0], sizes = [8, 256], strides = [1, 1]} : vector<64x256xf32> to vector<8x256xf32>
    %cst_17 = arith.constant dense<0.000000e+00> : vector<8x256xf32>
    %86 = tpu.matmul %84, %0, %cst_17 {dimension_numbers = #tpu.dot_dimension_numbers<[1], [0], [0], [1], [0, 0, 1, 1], [], []>} : vector<8x64xf32>, vector<64x256xf32>, vector<8x256xf32> -> vector<8x256xf32>
    %87 = arith.addf %85, %86 : vector<8x256xf32>
    %88 = vector.extract_strided_slice %87 {offsets = [0, 0], sizes = [8, 192], strides = [1, 1]} : vector<8x256xf32> to vector<8x192xf32>
    %89 = arith.negf %88 : vector<8x192xf32>
    %90 = math.exp %89 : vector<8x192xf32>
    %cst_18 = arith.constant 1.000000e+00 : f32
    %91 = vector.broadcast %cst_18 : f32 to vector<8x192xf32>
    %92 = arith.addf %91, %90 : vector<8x192xf32>
    %93 = arith.divf %91, %92 : vector<8x192xf32>
    %94 = vector.extract_strided_slice %87 {offsets = [0, 192], sizes = [8, 64], strides = [1, 1]} : vector<8x256xf32> to vector<8x64xf32>
    %95 = math.tanh %94 : vector<8x64xf32>
    %96 = vector.extract_strided_slice %93 {offsets = [0, 0], sizes = [8, 64], strides = [1, 1]} : vector<8x192xf32> to vector<8x64xf32>
    %97 = vector.extract_strided_slice %93 {offsets = [0, 64], sizes = [8, 64], strides = [1, 1]} : vector<8x192xf32> to vector<8x64xf32>
    %98 = vector.extract_strided_slice %93 {offsets = [0, 128], sizes = [8, 64], strides = [1, 1]} : vector<8x192xf32> to vector<8x64xf32>
    %99 = arith.mulf %97, %82 : vector<8x64xf32>
    %100 = arith.mulf %96, %95 : vector<8x64xf32>
    %101 = arith.addf %99, %100 : vector<8x64xf32>
    %102 = math.tanh %101 : vector<8x64xf32>
    %103 = arith.mulf %98, %102 : vector<8x64xf32>
    %104 = vector.extract_strided_slice %6 {offsets = [40, 0], sizes = [8, 256], strides = [1, 1]} : vector<64x256xf32> to vector<8x256xf32>
    %cst_19 = arith.constant dense<0.000000e+00> : vector<8x256xf32>
    %105 = tpu.matmul %103, %0, %cst_19 {dimension_numbers = #tpu.dot_dimension_numbers<[1], [0], [0], [1], [0, 0, 1, 1], [], []>} : vector<8x64xf32>, vector<64x256xf32>, vector<8x256xf32> -> vector<8x256xf32>
    %106 = arith.addf %104, %105 : vector<8x256xf32>
    %107 = vector.extract_strided_slice %106 {offsets = [0, 0], sizes = [8, 192], strides = [1, 1]} : vector<8x256xf32> to vector<8x192xf32>
    %108 = arith.negf %107 : vector<8x192xf32>
    %109 = math.exp %108 : vector<8x192xf32>
    %cst_20 = arith.constant 1.000000e+00 : f32
    %110 = vector.broadcast %cst_20 : f32 to vector<8x192xf32>
    %111 = arith.addf %110, %109 : vector<8x192xf32>
    %112 = arith.divf %110, %111 : vector<8x192xf32>
    %113 = vector.extract_strided_slice %106 {offsets = [0, 192], sizes = [8, 64], strides = [1, 1]} : vector<8x256xf32> to vector<8x64xf32>
    %114 = math.tanh %113 : vector<8x64xf32>
    %115 = vector.extract_strided_slice %112 {offsets = [0, 0], sizes = [8, 64], strides = [1, 1]} : vector<8x192xf32> to vector<8x64xf32>
    %116 = vector.extract_strided_slice %112 {offsets = [0, 64], sizes = [8, 64], strides = [1, 1]} : vector<8x192xf32> to vector<8x64xf32>
    %117 = vector.extract_strided_slice %112 {offsets = [0, 128], sizes = [8, 64], strides = [1, 1]} : vector<8x192xf32> to vector<8x64xf32>
    %118 = arith.mulf %116, %101 : vector<8x64xf32>
    %119 = arith.mulf %115, %114 : vector<8x64xf32>
    %120 = arith.addf %118, %119 : vector<8x64xf32>
    %121 = math.tanh %120 : vector<8x64xf32>
    %122 = arith.mulf %117, %121 : vector<8x64xf32>
    %123 = vector.extract_strided_slice %6 {offsets = [48, 0], sizes = [8, 256], strides = [1, 1]} : vector<64x256xf32> to vector<8x256xf32>
    %cst_21 = arith.constant dense<0.000000e+00> : vector<8x256xf32>
    %124 = tpu.matmul %122, %0, %cst_21 {dimension_numbers = #tpu.dot_dimension_numbers<[1], [0], [0], [1], [0, 0, 1, 1], [], []>} : vector<8x64xf32>, vector<64x256xf32>, vector<8x256xf32> -> vector<8x256xf32>
    %125 = arith.addf %123, %124 : vector<8x256xf32>
    %126 = vector.extract_strided_slice %125 {offsets = [0, 0], sizes = [8, 192], strides = [1, 1]} : vector<8x256xf32> to vector<8x192xf32>
    %127 = arith.negf %126 : vector<8x192xf32>
    %128 = math.exp %127 : vector<8x192xf32>
    %cst_22 = arith.constant 1.000000e+00 : f32
    %129 = vector.broadcast %cst_22 : f32 to vector<8x192xf32>
    %130 = arith.addf %129, %128 : vector<8x192xf32>
    %131 = arith.divf %129, %130 : vector<8x192xf32>
    %132 = vector.extract_strided_slice %125 {offsets = [0, 192], sizes = [8, 64], strides = [1, 1]} : vector<8x256xf32> to vector<8x64xf32>
    %133 = math.tanh %132 : vector<8x64xf32>
    %134 = vector.extract_strided_slice %131 {offsets = [0, 0], sizes = [8, 64], strides = [1, 1]} : vector<8x192xf32> to vector<8x64xf32>
    %135 = vector.extract_strided_slice %131 {offsets = [0, 64], sizes = [8, 64], strides = [1, 1]} : vector<8x192xf32> to vector<8x64xf32>
    %136 = vector.extract_strided_slice %131 {offsets = [0, 128], sizes = [8, 64], strides = [1, 1]} : vector<8x192xf32> to vector<8x64xf32>
    %137 = arith.mulf %135, %120 : vector<8x64xf32>
    %138 = arith.mulf %134, %133 : vector<8x64xf32>
    %139 = arith.addf %137, %138 : vector<8x64xf32>
    %140 = math.tanh %139 : vector<8x64xf32>
    %141 = arith.mulf %136, %140 : vector<8x64xf32>
    %142 = vector.extract_strided_slice %6 {offsets = [56, 0], sizes = [8, 256], strides = [1, 1]} : vector<64x256xf32> to vector<8x256xf32>
    %cst_23 = arith.constant dense<0.000000e+00> : vector<8x256xf32>
    %143 = tpu.matmul %141, %0, %cst_23 {dimension_numbers = #tpu.dot_dimension_numbers<[1], [0], [0], [1], [0, 0, 1, 1], [], []>} : vector<8x64xf32>, vector<64x256xf32>, vector<8x256xf32> -> vector<8x256xf32>
    %144 = arith.addf %142, %143 : vector<8x256xf32>
    %145 = vector.extract_strided_slice %144 {offsets = [0, 0], sizes = [8, 192], strides = [1, 1]} : vector<8x256xf32> to vector<8x192xf32>
    %146 = arith.negf %145 : vector<8x192xf32>
    %147 = math.exp %146 : vector<8x192xf32>
    %cst_24 = arith.constant 1.000000e+00 : f32
    %148 = vector.broadcast %cst_24 : f32 to vector<8x192xf32>
    %149 = arith.addf %148, %147 : vector<8x192xf32>
    %150 = arith.divf %148, %149 : vector<8x192xf32>
    %151 = vector.extract_strided_slice %144 {offsets = [0, 192], sizes = [8, 64], strides = [1, 1]} : vector<8x256xf32> to vector<8x64xf32>
    %152 = math.tanh %151 : vector<8x64xf32>
    %153 = vector.extract_strided_slice %150 {offsets = [0, 0], sizes = [8, 64], strides = [1, 1]} : vector<8x192xf32> to vector<8x64xf32>
    %154 = vector.extract_strided_slice %150 {offsets = [0, 64], sizes = [8, 64], strides = [1, 1]} : vector<8x192xf32> to vector<8x64xf32>
    %155 = vector.extract_strided_slice %150 {offsets = [0, 128], sizes = [8, 64], strides = [1, 1]} : vector<8x192xf32> to vector<8x64xf32>
    %156 = arith.mulf %154, %139 : vector<8x64xf32>
    %157 = arith.mulf %153, %152 : vector<8x64xf32>
    %158 = arith.addf %156, %157 : vector<8x64xf32>
    %159 = math.tanh %158 : vector<8x64xf32>
    %160 = arith.mulf %155, %159 : vector<8x64xf32>
    %c0_25 = arith.constant 0 : index
    %c0_26 = arith.constant 0 : index
    %161 = vector.load %arg4[%c0_25, %c0_26] : memref<64x128xf32, #tpu.memory_space<vmem>>, vector<64x128xf32>
    %cst_27 = arith.constant dense<0.000000e+00> : vector<8x128xf32>
    %162 = tpu.matmul %160, %161, %cst_27 {dimension_numbers = #tpu.dot_dimension_numbers<[1], [0], [0], [1], [0, 0, 1, 1], [], []>} : vector<8x64xf32>, vector<64x128xf32>, vector<8x128xf32> -> vector<8x128xf32>
    %c0_28 = arith.constant 0 : index
    %c0_29 = arith.constant 0 : index
    %163 = vector.load %arg5[%c0_28, %c0_29] : memref<1x128xf32, #tpu.memory_space<vmem>>, vector<1x128xf32>
    %164 = vector.broadcast %163 : vector<1x128xf32> to vector<8x128xf32>
    %165 = arith.addf %162, %164 : vector<8x128xf32>
    %c0_30 = arith.constant 0 : index
    %c0_31 = arith.constant 0 : index
    %166 = vector.load %arg6[%c0_30, %c0_31] : memref<8x128xf32, #tpu.memory_space<vmem>>, vector<8x128xf32>
    tpu.vector_store %arg6[%c0_30, %c0_31], %165 {strides = array<i32>} : memref<8x128xf32, #tpu.memory_space<vmem>>, vector<8x128xf32>,
    return
  }
}

</mosaic_0001>

<llo_original>
// kernel: tpu_custom_call.1
$region0: #{tpu_custom_call.1}
  #allocation0 [shape = 'u32[]', space=smem, size = 0x4, offset = 0x4, fixed_abs, tag = 'smem constant byte address 0x4 - core index']
  #allocation1 [shape = 'u32[72,128]{1,0:T(1,128)}', space=vmem, size = 0x9000, scoped, tag = 'internal scratch']
  %s0 = inlined_call_operand.hbm [shape: f32[64,64], index: 0, kind: input, shape index: {}]
  %s1 = inlined_call_operand.hbm [shape: f32[64,256], index: 1, kind: input, shape index: {}]
  %s2 = inlined_call_operand.hbm [shape: f32[64,256], index: 2, kind: input, shape index: {}]
  %s3 = inlined_call_operand.vmem [shape: f32[1,256], index: 3, kind: input, shape index: {}]
  %s4 = inlined_call_operand.hbm [shape: f32[64,128], index: 4, kind: input, shape index: {}]
  %s5 = inlined_call_operand.vmem [shape: f32[1,128], index: 5, kind: input, shape index: {}]
  %s6 = inlined_call_operand.hbm [shape: f32[8,128], index: 6, kind: output, shape index: {}]
  %s7 = sld [smem:[#allocation0]]
  $region50: #{tpu_custom_call.1} parent=0
    _
  %s9 = ssub.s32 1, %s7
  %s10 = scalar_select 0, %s9, %s7
  $region1: #{tpu_custom_call.1} parent=0
    #allocation2 [shape = 'u8[32768]{0}', space=vmem, size = 0x8000, scoped, tag = 'input window, operand 0, single buffered']
    #allocation3 [shape = 's32[1]{0}', space=sflag, size = 0x4, scoped, tag = 'scoped memory for tpu_custom_call.1']
    #allocation4 [shape = 's32[1]{0}', space=sflag, size = 0x4, scoped, tag = 'scoped memory for tpu_custom_call.1']
    #allocation5 [shape = 'u8[65536]{0}', space=vmem, size = 0x10000, scoped, tag = 'input window, operand 1, single buffered']
    #allocation6 [shape = 's32[1]{0}', space=sflag, size = 0x4, scoped, tag = 'scoped memory for tpu_custom_call.1']
    #allocation7 [shape = 'u8[65536]{0}', space=vmem, size = 0x10000, scoped, tag = 'input window, operand 2, single buffered']
    #allocation8 [shape = 'u8[32768]{0}', space=vmem, size = 0x8000, scoped, tag = 'input window, operand 4, single buffered']
    #allocation9 [shape = 's32[1]{0}', space=sflag, size = 0x4, scoped, tag = 'scoped memory for tpu_custom_call.1']
    #allocation10 [shape = 'u8[4096]{0}', space=vmem, size = 0x1000, scoped, tag = 'output window, operand 0, single buffered']
    %11 = vsyncpa [#allocation3], 0
    %12 = vsyncpa [#allocation6], 0
    %13 = vsyncpa [#allocation9], 0
    %14 = vsyncpa [#allocation4], 0
    // Predicated region
    $region2: #{tpu_custom_call.1} parent=1 // pred_check
      _
    $region3: #{tpu_custom_call.1} parent=1 // pred_check_branch
      %16 = sbr.rel (0) target = $region5
    $region4: #{tpu_custom_call.1} parent=1 // pred_region
      %18 = vsyncadd [#allocation3], 0
      %s19 = sshll.u32 %s0, 4
      %s20 = int_to_ptr.hbm [resolvable:$true] %s19
      %s21 = sshll.u32 [#allocation2], 4
      %s22 = int_to_ptr.vmem [resolvable:$true] %s21
      %27 = dma.hbm_to_vmem [thread:$0]  %s20, 1024, %s22, [#allocation3], 128, 128, 8
    $region5: #{tpu_custom_call.1} parent=1 // pred_fallthru
      _
    // Predicated region
    $region6: #{tpu_custom_call.1} parent=1 // pred_check
      _
    $region7: #{tpu_custom_call.1} parent=1 // pred_check_branch
      %29 = sbr.rel (0) target = $region9
    $region8: #{tpu_custom_call.1} parent=1 // pred_region
      %31 = vsyncadd [#allocation6], 0
      %s32 = sshll.u32 %s1, 4
      %s33 = int_to_ptr.hbm [resolvable:$true] %s32
      %s34 = sshll.u32 [#allocation5], 4
      %s35 = int_to_ptr.vmem [resolvable:$true] %s34
      %40 = dma.hbm_to_vmem [thread:$0]  %s33, 2048, %s35, [#allocation6], 256, 256, 16
    $region9: #{tpu_custom_call.1} parent=1 // pred_fallthru
      _
    // Predicated region
    $region10: #{tpu_custom_call.1} parent=1 // pred_check
      _
    $region11: #{tpu_custom_call.1} parent=1 // pred_check_branch
      %42 = sbr.rel (0) target = $region13
    $region12: #{tpu_custom_call.1} parent=1 // pred_region
      %44 = vsyncadd [#allocation6], 0
      %s45 = sshll.u32 %s2, 4
      %s46 = int_to_ptr.hbm [resolvable:$true] %s45
      %s47 = sshll.u32 [#allocation7], 4
      %s48 = int_to_ptr.vmem [resolvable:$true] %s47
      %53 = dma.hbm_to_vmem [thread:$0]  %s46, 2048, %s48, [#allocation6], 256, 256, 16
    $region13: #{tpu_custom_call.1} parent=1 // pred_fallthru
      _
    // Predicated region
    $region14: #{tpu_custom_call.1} parent=1 // pred_check
      _
    $region15: #{tpu_custom_call.1} parent=1 // pred_check_branch
      %55 = sbr.rel (0) target = $region17
    $region16: #{tpu_custom_call.1} parent=1 // pred_region
      _
    $region17: #{tpu_custom_call.1} parent=1 // pred_fallthru
      _
    // Predicated region
    $region18: #{tpu_custom_call.1} parent=1 // pred_check
      _
    $region19: #{tpu_custom_call.1} parent=1 // pred_check_branch
      %57 = sbr.rel (0) target = $region21
    $region20: #{tpu_custom_call.1} parent=1 // pred_region
      %59 = vsyncadd [#allocation9], 0
      %s60 = sshll.u32 %s4, 4
      %s61 = int_to_ptr.hbm [resolvable:$true] %s60
      %s62 = sshll.u32 [#allocation8], 4
      %s63 = int_to_ptr.vmem [resolvable:$true] %s62
      %68 = dma.hbm_to_vmem [thread:$0]  %s61, 1024, %s63, [#allocation9], 128, 128, 8
    $region21: #{tpu_custom_call.1} parent=1 // pred_fallthru
      _
    // Predicated region
    $region22: #{tpu_custom_call.1} parent=1 // pred_check
      _
    $region23: #{tpu_custom_call.1} parent=1 // pred_check_branch
      %70 = sbr.rel (0) target = $region25
    $region24: #{tpu_custom_call.1} parent=1 // pred_region
      _
    $region25: #{tpu_custom_call.1} parent=1 // pred_fallthru
      _
    // Predicated region
    $region26: #{tpu_custom_call.1} parent=1 // pred_check
      _
    $region27: #{tpu_custom_call.1} parent=1 // pred_check_branch
      %72 = sbr.rel (0) target = $region29
    $region28: #{tpu_custom_call.1} parent=1 // pred_region
      %74 = dma.done [#allocation3], 1024
    $region29: #{tpu_custom_call.1} parent=1 // pred_fallthru
      _
    // Predicated region
    $region30: #{tpu_custom_call.1} parent=1 // pred_check
      _
    $region31: #{tpu_custom_call.1} parent=1 // pred_check_branch
      %76 = sbr.rel (0) target = $region33
    $region32: #{tpu_custom_call.1} parent=1 // pred_region
      %78 = dma.done [#allocation6], 2048
    $region33: #{tpu_custom_call.1} parent=1 // pred_fallthru
      _
    // Predicated region
    $region34: #{tpu_custom_call.1} parent=1 // pred_check
      _
    $region35: #{tpu_custom_call.1} parent=1 // pred_check_branch
      %80 = sbr.rel (0) target = $region37
    $region36: #{tpu_custom_call.1} parent=1 // pred_region
      %82 = dma.done [#allocation6], 2048
    $region37: #{tpu_custom_call.1} parent=1 // pred_fallthru
      _
    // Predicated region
    $region38: #{tpu_custom_call.1} parent=1 // pred_check
      _
    $region39: #{tpu_custom_call.1} parent=1 // pred_check_branch
      %84 = sbr.rel (0) target = $region41
    $region40: #{tpu_custom_call.1} parent=1 // pred_region
      %86 = dma.done [#allocation9], 1024
    $region41: #{tpu_custom_call.1} parent=1 // pred_fallthru
      _
    %v87 = vld [vmem:[#allocation7] sm:$0xff]
    %v88 = vld [vmem:[#allocation7 + $0x8] sm:$0xff]
    %v89 = vld [vmem:[#allocation7 + $0x10] sm:$0xff]
    %v90 = vld [vmem:[#allocation7 + $0x18] sm:$0xff]
    %v91 = vld [vmem:[#allocation7 + $0x20] sm:$0xff]
    %v92 = vld [vmem:[#allocation7 + $0x28] sm:$0xff]
    %v93 = vld [vmem:[#allocation7 + $0x30] sm:$0xff]
    %v94 = vld [vmem:[#allocation7 + $0x38] sm:$0xff]
    %v95 = vld [vmem:[#allocation7 + $0x40] sm:$0xff]
    %v96 = vld [vmem:[#allocation7 + $0x48] sm:$0xff]
    %v97 = vld [vmem:[#allocation7 + $0x50] sm:$0xff]
    %v98 = vld [vmem:[#allocation7 + $0x58] sm:$0xff]
    %v99 = vld [vmem:[#allocation7 + $0x60] sm:$0xff]
    %v100 = vld [vmem:[#allocation7 + $0x68] sm:$0xff]
    %v101 = vld [vmem:[#allocation7 + $0x70] sm:$0xff]
    %v102 = vld [vmem:[#allocation7 + $0x78] sm:$0xff]
    %v103 = vld [vmem:[#allocation2] sm:$0xff]
    %v104 = vld [vmem:[#allocation2 + $0x8] sm:$0xff]
    %v105 = vld [vmem:[#allocation2 + $0x10] sm:$0xff]
    %v106 = vld [vmem:[#allocation2 + $0x18] sm:$0xff]
    %v107 = vld [vmem:[#allocation2 + $0x20] sm:$0xff]
    %v108 = vld [vmem:[#allocation2 + $0x28] sm:$0xff]
    %v109 = vld [vmem:[#allocation2 + $0x30] sm:$0xff]
    %v110 = vld [vmem:[#allocation2 + $0x38] sm:$0xff]
    %v111 = vld [vmem:[#allocation5] sm:$0xff]
    %v112 = vld [vmem:[#allocation5 + $0x8] sm:$0xff]
    %v113 = vld [vmem:[#allocation5 + $0x10] sm:$0xff]
    %v114 = vld [vmem:[#allocation5 + $0x18] sm:$0xff]
    %v115 = vld [vmem:[#allocation5 + $0x20] sm:$0xff]
    %v116 = vld [vmem:[#allocation5 + $0x28] sm:$0xff]
    %v117 = vld [vmem:[#allocation5 + $0x30] sm:$0xff]
    %v118 = vld [vmem:[#allocation5 + $0x38] sm:$0xff]
    %v119 = vld [vmem:[#allocation5 + $0x40] sm:$0xff]
    %v120 = vld [vmem:[#allocation5 + $0x48] sm:$0xff]
    %v121 = vld [vmem:[#allocation5 + $0x50] sm:$0xff]
    %v122 = vld [vmem:[#allocation5 + $0x58] sm:$0xff]
    %v123 = vld [vmem:[#allocation5 + $0x60] sm:$0xff]
    %v124 = vld [vmem:[#allocation5 + $0x68] sm:$0xff]
    %v125 = vld [vmem:[#allocation5 + $0x70] sm:$0xff]
    %v126 = vld [vmem:[#allocation5 + $0x78] sm:$0xff]
    %v127 = vld [vmem:[%s3] sm:$0x3]
    %v129 = vperm.slane %v127, 0
    %v130 = vperm.slane %v127, 1
    %vm133 = vcmask 523264
    %v135 = vsel %vm133, %v103, 0
    %v138 = vsel %vm133, %v104, 0
    %v141 = vsel %vm133, %v105, 0
    %v144 = vsel %vm133, %v106, 0
    %v147 = vsel %vm133, %v107, 0
    %v150 = vsel %vm133, %v108, 0
    %v153 = vsel %vm133, %v109, 0
    %v156 = vsel %vm133, %v110, 0
    %158 = vmatpush.msra.mxu0 0.0
    %159 = vmatpush.msra.mxu0 0.0
    %160 = vmatpush.msra.mxu0 0.0
    %161 = vmatpush.msra.mxu0 0.0
    %162 = vmatpush.msra.mxu0 0.0
    %163 = vmatpush.msra.mxu0 0.0
    %164 = vmatpush.msra.mxu0 0.0
    %165 = vmatpush.msra.mxu0 0.0
    %166 = vmatpush.msra.mxu0 %v125
    %167 = vmatpush.msra.mxu0 %v123
    %168 = vmatpush.msra.mxu0 %v121
    %169 = vmatpush.msra.mxu0 %v119
    %170 = vmatpush.msra.mxu0 %v117
    %171 = vmatpush.msra.mxu0 %v115
    %172 = vmatpush.msra.mxu0 %v113
    %173 = vmatpush.msra.mxu0 %v111
    %174 = vmatmul.f32.gmra.mxu0 %v135
    %v175 = vpop.f32.mrf.mxu0
    %v176 = vadd.f32 %v129, %v175
    %177 = vmatmul.f32.gmra.mxu0 %v138
    %v178 = vpop.f32.mrf.mxu0
    %v179 = vadd.f32 %v129, %v178
    %180 = vmatmul.f32.gmra.mxu0 %v141
    %v181 = vpop.f32.mrf.mxu0
    %v182 = vadd.f32 %v129, %v181
    %183 = vmatmul.f32.gmra.mxu0 %v144
    %v184 = vpop.f32.mrf.mxu0
    %v185 = vadd.f32 %v129, %v184
    %186 = vmatmul.f32.gmra.mxu0 %v147
    %v187 = vpop.f32.mrf.mxu0
    %v188 = vadd.f32 %v129, %v187
    %189 = vmatmul.f32.gmra.mxu0 %v150
    %v190 = vpop.f32.mrf.mxu0
    %v191 = vadd.f32 %v129, %v190
    %192 = vmatmul.f32.gmra.mxu0 %v153
    %v193 = vpop.f32.mrf.mxu0
    %v194 = vadd.f32 %v129, %v193
    %195 = vmatmul.f32.gmra.mxu0 %v156
    %v196 = vpop.f32.mrf.mxu0
    %v197 = vadd.f32 %v129, %v196
    %198 = vdwg.mxu0
    %199 = vmatpush.msra.mxu0 0.0
    %200 = vmatpush.msra.mxu0 0.0
    %201 = vmatpush.msra.mxu0 0.0
    %202 = vmatpush.msra.mxu0 0.0
    %203 = vmatpush.msra.mxu0 0.0
    %204 = vmatpush.msra.mxu0 0.0
    %205 = vmatpush.msra.mxu0 0.0
    %206 = vmatpush.msra.mxu0 0.0
    %207 = vmatpush.msra.mxu0 %v126
    %208 = vmatpush.msra.mxu0 %v124
    %209 = vmatpush.msra.mxu0 %v122
    %210 = vmatpush.msra.mxu0 %v120
    %211 = vmatpush.msra.mxu0 %v118
    %212 = vmatpush.msra.mxu0 %v116
    %213 = vmatpush.msra.mxu0 %v114
    %214 = vmatpush.msra.mxu0 %v112
    %215 = vmatmul.f32.gmra.mxu0 %v135
    %v216 = vpop.f32.mrf.mxu0
    %v217 = vadd.f32 %v130, %v216
    %218 = vmatmul.f32.gmra.mxu0 %v138
    %v219 = vpop.f32.mrf.mxu0
    %v220 = vadd.f32 %v130, %v219
    %221 = vmatmul.f32.gmra.mxu0 %v141
    %v222 = vpop.f32.mrf.mxu0
    %v223 = vadd.f32 %v130, %v222
    %224 = vmatmul.f32.gmra.mxu0 %v144
    %v225 = vpop.f32.mrf.mxu0
    %v226 = vadd.f32 %v130, %v225
    %227 = vmatmul.f32.gmra.mxu0 %v147
    %v228 = vpop.f32.mrf.mxu0
    %v229 = vadd.f32 %v130, %v228
    %230 = vmatmul.f32.gmra.mxu0 %v150
    %v231 = vpop.f32.mrf.mxu0
    %v232 = vadd.f32 %v130, %v231
    %233 = vmatmul.f32.gmra.mxu0 %v153
    %v234 = vpop.f32.mrf.mxu0
    %v235 = vadd.f32 %v130, %v234
    %236 = vmatmul.f32.gmra.mxu0 %v156
    %v237 = vpop.f32.mrf.mxu0
    %v238 = vadd.f32 %v130, %v237
    %239 = vdwg.mxu0
    %v241 = vsel %vm133, 0.0, 0
    %243 = vmatpush.msra.mxu0 0.0
    %244 = vmatpush.msra.mxu0 0.0
    %245 = vmatpush.msra.mxu0 0.0
    %246 = vmatpush.msra.mxu0 0.0
    %247 = vmatpush.msra.mxu0 0.0
    %248 = vmatpush.msra.mxu0 0.0
    %249 = vmatpush.msra.mxu0 0.0
    %250 = vmatpush.msra.mxu0 0.0
    %251 = vmatpush.msra.mxu0 %v101
    %252 = vmatpush.msra.mxu0 %v99
    %253 = vmatpush.msra.mxu0 %v97
    %254 = vmatpush.msra.mxu0 %v95
    %255 = vmatpush.msra.mxu0 %v93
    %256 = vmatpush.msra.mxu0 %v91
    %257 = vmatpush.msra.mxu0 %v89
    %258 = vmatpush.msra.mxu0 %v87
    %259 = vmatmul.f32.gmra.mxu0 %v241
    %v260 = vpop.f32.mrf.mxu0
    %v261 = vadd.f32 0.0, %v260
    %262 = vdwg.mxu0
    %263 = vmatpush.msra.mxu0 0.0
    %264 = vmatpush.msra.mxu0 0.0
    %265 = vmatpush.msra.mxu0 0.0
    %266 = vmatpush.msra.mxu0 0.0
    %267 = vmatpush.msra.mxu0 0.0
    %268 = vmatpush.msra.mxu0 0.0
    %269 = vmatpush.msra.mxu0 0.0
    %270 = vmatpush.msra.mxu0 0.0
    %271 = vmatpush.msra.mxu0 %v102
    %272 = vmatpush.msra.mxu0 %v100
    %273 = vmatpush.msra.mxu0 %v98
    %274 = vmatpush.msra.mxu0 %v96
    %275 = vmatpush.msra.mxu0 %v94
    %276 = vmatpush.msra.mxu0 %v92
    %277 = vmatpush.msra.mxu0 %v90
    %278 = vmatpush.msra.mxu0 %v88
    %279 = vmatmul.f32.gmra.mxu0 %v241
    %v280 = vpop.f32.mrf.mxu0
    %v281 = vadd.f32 0.0, %v280
    %282 = vdwg.mxu0
    %v283 = vadd.f32 %v176, %v261
    %v284 = vadd.f32 %v217, %v281
    %v285 = vxor.u32 %v283, 2147483648
    %v286 = vxor.u32 %v284, 2147483648
    %v287 = vmul.f32 %v285, 1.442695
    %v288 = vpow.pop %v287
    %v289 = vmul.f32 %v286, 1.442695
    %v290 = vpow.pop %v289
    %v291 = vadd.f32 %v288, 1.0
    %v292 = vadd.f32 %v290, 1.0
    %v293 = vrcp.pop %v291
    %v294 = vmul.f32 %v291, %v293
    %v295 = vsub.f32 1.0, %v294
    %v296 = vmul.f32 %v293, %v295
    %v297 = vadd.f32 %v293, %v296
    %vm298 = vweird.f32 %v291
    %vm299 = vweird.f32 %v293
    %vm300 = vmor %vm298, %vm299
    %v301 = vsel %vm300, %v293, %v297
    %v302 = vand.u32 2147483647, %v291
    %vm303 = vcmp.eq.f32.partialorder %v302, 8.507059e+37
    %v304 = vand.u32 %v291, 2147483648
    %v305 = vor.u32 1.1754944e-38, %v304
    %v306 = vsel %vm303, %v305, %v301
    %v307 = vmul.f32 1.0, %v306
    %v308 = vrcp.pop %v292
    %v309 = vmul.f32 %v292, %v308
    %v310 = vsub.f32 1.0, %v309
    %v311 = vmul.f32 %v308, %v310
    %v312 = vadd.f32 %v308, %v311
    %vm313 = vweird.f32 %v292
    %vm314 = vweird.f32 %v308
    %vm315 = vmor %vm313, %vm314
    %v316 = vsel %vm315, %v308, %v312
    %v317 = vand.u32 2147483647, %v292
    %vm318 = vcmp.eq.f32.partialorder %v317, 8.507059e+37
    %v319 = vand.u32 %v292, 2147483648
    %v320 = vor.u32 1.1754944e-38, %v319
    %v321 = vsel %vm318, %v320, %v316
    %v322 = vmul.f32 1.0, %v321
    %v323 = vtanh.pop %v284
    %v324 = vmul.f32 %v307, 0.0
    %326 = vrot.lane.b32.xlu0 %v323, 64
    %v327 = vpop.permute.xlu0 %326
    %v329 = vmul.f32 %v307, %v327
    %331 = vrot.lane.b32.xlu0 %v329, 64
    %v332 = vpop.permute.xlu0 %331
    %v334 = vadd.f32 %v324, %v332
    %v335 = vtanh.pop %v334
    %337 = vrot.lane.b32.xlu0 %v335, 64
    %v338 = vpop.permute.xlu0 %337
    %v340 = vmul.f32 %v322, %v338
    %v342 = vsel %vm133, %v340, 0
    %344 = vmatpush.msra.mxu0 0.0
    %345 = vmatpush.msra.mxu0 0.0
    %346 = vmatpush.msra.mxu0 0.0
    %347 = vmatpush.msra.mxu0 0.0
    %348 = vmatpush.msra.mxu0 0.0
    %349 = vmatpush.msra.mxu0 0.0
    %350 = vmatpush.msra.mxu0 0.0
    %351 = vmatpush.msra.mxu0 0.0
    %352 = vmatpush.msra.mxu0 %v101
    %353 = vmatpush.msra.mxu0 %v99
    %354 = vmatpush.msra.mxu0 %v97
    %355 = vmatpush.msra.mxu0 %v95
    %356 = vmatpush.msra.mxu0 %v93
    %357 = vmatpush.msra.mxu0 %v91
    %358 = vmatpush.msra.mxu0 %v89
    %359 = vmatpush.msra.mxu0 %v87
    %360 = vmatmul.f32.gmra.mxu0 %v342
    %v361 = vpop.f32.mrf.mxu0
    %v362 = vadd.f32 0.0, %v361
    %363 = vdwg.mxu0
    %364 = vmatpush.msra.mxu0 0.0
    %365 = vmatpush.msra.mxu0 0.0
    %366 = vmatpush.msra.mxu0 0.0
    %367 = vmatpush.msra.mxu0 0.0
    %368 = vmatpush.msra.mxu0 0.0
    %369 = vmatpush.msra.mxu0 0.0
    %370 = vmatpush.msra.mxu0 0.0
    %371 = vmatpush.msra.mxu0 0.0
    %372 = vmatpush.msra.mxu0 %v102
    %373 = vmatpush.msra.mxu0 %v100
    %374 = vmatpush.msra.mxu0 %v98
    %375 = vmatpush.msra.mxu0 %v96
    %376 = vmatpush.msra.mxu0 %v94
    %377 = vmatpush.msra.mxu0 %v92
    %378 = vmatpush.msra.mxu0 %v90
    %379 = vmatpush.msra.mxu0 %v88
    %380 = vmatmul.f32.gmra.mxu0 %v342
    %v381 = vpop.f32.mrf.mxu0
    %v382 = vadd.f32 0.0, %v381
    %383 = vdwg.mxu0
    %v384 = vadd.f32 %v179, %v362
    %v385 = vadd.f32 %v220, %v382
    %v386 = vxor.u32 %v384, 2147483648
    %v387 = vxor.u32 %v385, 2147483648
    %v388 = vmul.f32 %v386, 1.442695
    %v389 = vpow.pop %v388
    %v390 = vmul.f32 %v387, 1.442695
    %v391 = vpow.pop %v390
    %v392 = vadd.f32 %v389, 1.0
    %v393 = vadd.f32 %v391, 1.0
    %v394 = vrcp.pop %v392
    %v395 = vmul.f32 %v392, %v394
    %v396 = vsub.f32 1.0, %v395
    %v397 = vmul.f32 %v394, %v396
    %v398 = vadd.f32 %v394, %v397
    %vm399 = vweird.f32 %v392
    %vm400 = vweird.f32 %v394
    %vm401 = vmor %vm399, %vm400
    %v402 = vsel %vm401, %v394, %v398
    %v403 = vand.u32 2147483647, %v392
    %vm404 = vcmp.eq.f32.partialorder %v403, 8.507059e+37
    %v405 = vand.u32 %v392, 2147483648
    %v406 = vor.u32 1.1754944e-38, %v405
    %v407 = vsel %vm404, %v406, %v402
    %v408 = vmul.f32 1.0, %v407
    %v409 = vrcp.pop %v393
    %v410 = vmul.f32 %v393, %v409
    %v411 = vsub.f32 1.0, %v410
    %v412 = vmul.f32 %v409, %v411
    %v413 = vadd.f32 %v409, %v412
    %vm414 = vweird.f32 %v393
    %vm415 = vweird.f32 %v409
    %vm416 = vmor %vm414, %vm415
    %v417 = vsel %vm416, %v409, %v413
    %v418 = vand.u32 2147483647, %v393
    %vm419 = vcmp.eq.f32.partialorder %v418, 8.507059e+37
    %v420 = vand.u32 %v393, 2147483648
    %v421 = vor.u32 1.1754944e-38, %v420
    %v422 = vsel %vm419, %v421, %v417
    %v423 = vmul.f32 1.0, %v422
    %v424 = vtanh.pop %v385
    %v425 = vmul.f32 %v408, %v334
    %427 = vrot.lane.b32.xlu0 %v424, 64
    %v428 = vpop.permute.xlu0 %427
    %v430 = vmul.f32 %v408, %v428
    %432 = vrot.lane.b32.xlu0 %v430, 64
    %v433 = vpop.permute.xlu0 %432
    %v435 = vadd.f32 %v425, %v433
    %v436 = vtanh.pop %v435
    %438 = vrot.lane.b32.xlu0 %v436, 64
    %v439 = vpop.permute.xlu0 %438
    %v441 = vmul.f32 %v423, %v439
    %v443 = vsel %vm133, %v441, 0
    %445 = vmatpush.msra.mxu0 0.0
    %446 = vmatpush.msra.mxu0 0.0
    %447 = vmatpush.msra.mxu0 0.0
    %448 = vmatpush.msra.mxu0 0.0
    %449 = vmatpush.msra.mxu0 0.0
    %450 = vmatpush.msra.mxu0 0.0
    %451 = vmatpush.msra.mxu0 0.0
    %452 = vmatpush.msra.mxu0 0.0
    %453 = vmatpush.msra.mxu0 %v101
    %454 = vmatpush.msra.mxu0 %v99
    %455 = vmatpush.msra.mxu0 %v97
    %456 = vmatpush.msra.mxu0 %v95
    %457 = vmatpush.msra.mxu0 %v93
    %458 = vmatpush.msra.mxu0 %v91
    %459 = vmatpush.msra.mxu0 %v89
    %460 = vmatpush.msra.mxu0 %v87
    %461 = vmatmul.f32.gmra.mxu0 %v443
    %v462 = vpop.f32.mrf.mxu0
    %v463 = vadd.f32 0.0, %v462
    %464 = vdwg.mxu0
    %465 = vmatpush.msra.mxu0 0.0
    %466 = vmatpush.msra.mxu0 0.0
    %467 = vmatpush.msra.mxu0 0.0
    %468 = vmatpush.msra.mxu0 0.0
    %469 = vmatpush.msra.mxu0 0.0
    %470 = vmatpush.msra.mxu0 0.0
    %471 = vmatpush.msra.mxu0 0.0
    %472 = vmatpush.msra.mxu0 0.0
    %473 = vmatpush.msra.mxu0 %v102
    %474 = vmatpush.msra.mxu0 %v100
    %475 = vmatpush.msra.mxu0 %v98
    %476 = vmatpush.msra.mxu0 %v96
    %477 = vmatpush.msra.mxu0 %v94
    %478 = vmatpush.msra.mxu0 %v92
    %479 = vmatpush.msra.mxu0 %v90
    %480 = vmatpush.msra.mxu0 %v88
    %481 = vmatmul.f32.gmra.mxu0 %v443
    %v482 = vpop.f32.mrf.mxu0
    %v483 = vadd.f32 0.0, %v482
    %484 = vdwg.mxu0
    %v485 = vadd.f32 %v182, %v463
    %v486 = vadd.f32 %v223, %v483
    %v487 = vxor.u32 %v485, 2147483648
    %v488 = vxor.u32 %v486, 2147483648
    %v489 = vmul.f32 %v487, 1.442695
    %v490 = vpow.pop %v489
    %v491 = vmul.f32 %v488, 1.442695
    %v492 = vpow.pop %v491
    %v493 = vadd.f32 %v490, 1.0
    %v494 = vadd.f32 %v492, 1.0
    %v495 = vrcp.pop %v493
    %v496 = vmul.f32 %v493, %v495
    %v497 = vsub.f32 1.0, %v496
    %v498 = vmul.f32 %v495, %v497
    %v499 = vadd.f32 %v495, %v498
    %vm500 = vweird.f32 %v493
    %vm501 = vweird.f32 %v495
    %vm502 = vmor %vm500, %vm501
    %v503 = vsel %vm502, %v495, %v499
    %v504 = vand.u32 2147483647, %v493
    %vm505 = vcmp.eq.f32.partialorder %v504, 8.507059e+37
    %v506 = vand.u32 %v493, 2147483648
    %v507 = vor.u32 1.1754944e-38, %v506
    %v508 = vsel %vm505, %v507, %v503
    %v509 = vmul.f32 1.0, %v508
    %v510 = vrcp.pop %v494
    %v511 = vmul.f32 %v494, %v510
    %v512 = vsub.f32 1.0, %v511
    %v513 = vmul.f32 %v510, %v512
    %v514 = vadd.f32 %v510, %v513
    %vm515 = vweird.f32 %v494
    %vm516 = vweird.f32 %v510
    %vm517 = vmor %vm515, %vm516
    %v518 = vsel %vm517, %v510, %v514
    %v519 = vand.u32 2147483647, %v494
    %vm520 = vcmp.eq.f32.partialorder %v519, 8.507059e+37
    %v521 = vand.u32 %v494, 2147483648
    %v522 = vor.u32 1.1754944e-38, %v521
    %v523 = vsel %vm520, %v522, %v518
    %v524 = vmul.f32 1.0, %v523
    %v525 = vtanh.pop %v486
    %v526 = vmul.f32 %v509, %v435
    %528 = vrot.lane.b32.xlu0 %v525, 64
    %v529 = vpop.permute.xlu0 %528
    %v531 = vmul.f32 %v509, %v529
    %533 = vrot.lane.b32.xlu0 %v531, 64
    %v534 = vpop.permute.xlu0 %533
    %v536 = vadd.f32 %v526, %v534
    %v537 = vtanh.pop %v536
    %539 = vrot.lane.b32.xlu0 %v537, 64
    %v540 = vpop.permute.xlu0 %539
    %v542 = vmul.f32 %v524, %v540
    %v544 = vsel %vm133, %v542, 0
    %546 = vmatpush.msra.mxu0 0.0
    %547 = vmatpush.msra.mxu0 0.0
    %548 = vmatpush.msra.mxu0 0.0
    %549 = vmatpush.msra.mxu0 0.0
    %550 = vmatpush.msra.mxu0 0.0
    %551 = vmatpush.msra.mxu0 0.0
    %552 = vmatpush.msra.mxu0 0.0
    %553 = vmatpush.msra.mxu0 0.0
    %554 = vmatpush.msra.mxu0 %v101
    %555 = vmatpush.msra.mxu0 %v99
    %556 = vmatpush.msra.mxu0 %v97
    %557 = vmatpush.msra.mxu0 %v95
    %558 = vmatpush.msra.mxu0 %v93
    %559 = vmatpush.msra.mxu0 %v91
    %560 = vmatpush.msra.mxu0 %v89
    %561 = vmatpush.msra.mxu0 %v87
    %562 = vmatmul.f32.gmra.mxu0 %v544
    %v563 = vpop.f32.mrf.mxu0
    %v564 = vadd.f32 0.0, %v563
    %565 = vdwg.mxu0
    %566 = vmatpush.msra.mxu0 0.0
    %567 = vmatpush.msra.mxu0 0.0
    %568 = vmatpush.msra.mxu0 0.0
    %569 = vmatpush.msra.mxu0 0.0
    %570 = vmatpush.msra.mxu0 0.0
    %571 = vmatpush.msra.mxu0 0.0
    %572 = vmatpush.msra.mxu0 0.0
    %573 = vmatpush.msra.mxu0 0.0
    %574 = vmatpush.msra.mxu0 %v102
    %575 = vmatpush.msra.mxu0 %v100
    %576 = vmatpush.msra.mxu0 %v98
    %577 = vmatpush.msra.mxu0 %v96
    %578 = vmatpush.msra.mxu0 %v94
    %579 = vmatpush.msra.mxu0 %v92
    %580 = vmatpush.msra.mxu0 %v90
    %581 = vmatpush.msra.mxu0 %v88
    %582 = vmatmul.f32.gmra.mxu0 %v544
    %v583 = vpop.f32.mrf.mxu0
    %v584 = vadd.f32 0.0, %v583
    %585 = vdwg.mxu0
    %v586 = vadd.f32 %v185, %v564
    %v587 = vadd.f32 %v226, %v584
    %v588 = vxor.u32 %v586, 2147483648
    %v589 = vxor.u32 %v587, 2147483648
    %v590 = vmul.f32 %v588, 1.442695
    %v591 = vpow.pop %v590
    %v592 = vmul.f32 %v589, 1.442695
    %v593 = vpow.pop %v592
    %v594 = vadd.f32 %v591, 1.0
    %v595 = vadd.f32 %v593, 1.0
    %v596 = vrcp.pop %v594
    %v597 = vmul.f32 %v594, %v596
    %v598 = vsub.f32 1.0, %v597
    %v599 = vmul.f32 %v596, %v598
    %v600 = vadd.f32 %v596, %v599
    %vm601 = vweird.f32 %v594
    %vm602 = vweird.f32 %v596
    %vm603 = vmor %vm601, %vm602
    %v604 = vsel %vm603, %v596, %v600
    %v605 = vand.u32 2147483647, %v594
    %vm606 = vcmp.eq.f32.partialorder %v605, 8.507059e+37
    %v607 = vand.u32 %v594, 2147483648
    %v608 = vor.u32 1.1754944e-38, %v607
    %v609 = vsel %vm606, %v608, %v604
    %v610 = vmul.f32 1.0, %v609
    %v611 = vrcp.pop %v595
    %v612 = vmul.f32 %v595, %v611
    %v613 = vsub.f32 1.0, %v612
    %v614 = vmul.f32 %v611, %v613
    %v615 = vadd.f32 %v611, %v614
    %vm616 = vweird.f32 %v595
    %vm617 = vweird.f32 %v611
    %vm618 = vmor %vm616, %vm617
    %v619 = vsel %vm618, %v611, %v615
    %v620 = vand.u32 2147483647, %v595
    %vm621 = vcmp.eq.f32.partialorder %v620, 8.507059e+37
    %v622 = vand.u32 %v595, 2147483648
    %v623 = vor.u32 1.1754944e-38, %v622
    %v624 = vsel %vm621, %v623, %v619
    %v625 = vmul.f32 1.0, %v624
    %v626 = vtanh.pop %v587
    %v627 = vmul.f32 %v610, %v536
    %629 = vrot.lane.b32.xlu0 %v626, 64
    %v630 = vpop.permute.xlu0 %629
    %v632 = vmul.f32 %v610, %v630
    %634 = vrot.lane.b32.xlu0 %v632, 64
    %v635 = vpop.permute.xlu0 %634
    %v637 = vadd.f32 %v627, %v635
    %v638 = vtanh.pop %v637
    %640 = vrot.lane.b32.xlu0 %v638, 64
    %v641 = vpop.permute.xlu0 %640
    %v643 = vmul.f32 %v625, %v641
    %v645 = vsel %vm133, %v643, 0
    %647 = vmatpush.msra.mxu0 0.0
    %648 = vmatpush.msra.mxu0 0.0
    %649 = vmatpush.msra.mxu0 0.0
    %650 = vmatpush.msra.mxu0 0.0
    %651 = vmatpush.msra.mxu0 0.0
    %652 = vmatpush.msra.mxu0 0.0
    %653 = vmatpush.msra.mxu0 0.0
    %654 = vmatpush.msra.mxu0 0.0
    %655 = vmatpush.msra.mxu0 %v101
    %656 = vmatpush.msra.mxu0 %v99
    %657 = vmatpush.msra.mxu0 %v97
    %658 = vmatpush.msra.mxu0 %v95
    %659 = vmatpush.msra.mxu0 %v93
    %660 = vmatpush.msra.mxu0 %v91
    %661 = vmatpush.msra.mxu0 %v89
    %662 = vmatpush.msra.mxu0 %v87
    %663 = vmatmul.f32.gmra.mxu0 %v645
    %v664 = vpop.f32.mrf.mxu0
    %v665 = vadd.f32 0.0, %v664
    %666 = vdwg.mxu0
    %667 = vmatpush.msra.mxu0 0.0
    %668 = vmatpush.msra.mxu0 0.0
    %669 = vmatpush.msra.mxu0 0.0
    %670 = vmatpush.msra.mxu0 0.0
    %671 = vmatpush.msra.mxu0 0.0
    %672 = vmatpush.msra.mxu0 0.0
    %673 = vmatpush.msra.mxu0 0.0
    %674 = vmatpush.msra.mxu0 0.0
    %675 = vmatpush.msra.mxu0 %v102
    %676 = vmatpush.msra.mxu0 %v100
    %677 = vmatpush.msra.mxu0 %v98
    %678 = vmatpush.msra.mxu0 %v96
    %679 = vmatpush.msra.mxu0 %v94
    %680 = vmatpush.msra.mxu0 %v92
    %681 = vmatpush.msra.mxu0 %v90
    %682 = vmatpush.msra.mxu0 %v88
    %683 = vmatmul.f32.gmra.mxu0 %v645
    %v684 = vpop.f32.mrf.mxu0
    %v685 = vadd.f32 0.0, %v684
    %686 = vdwg.mxu0
    %v687 = vadd.f32 %v188, %v665
    %v688 = vadd.f32 %v229, %v685
    %v689 = vxor.u32 %v687, 2147483648
    %v690 = vxor.u32 %v688, 2147483648
    %v691 = vmul.f32 %v689, 1.442695
    %v692 = vpow.pop %v691
    %v693 = vmul.f32 %v690, 1.442695
    %v694 = vpow.pop %v693
    %v695 = vadd.f32 %v692, 1.0
    %v696 = vadd.f32 %v694, 1.0
    %v697 = vrcp.pop %v695
    %v698 = vmul.f32 %v695, %v697
    %v699 = vsub.f32 1.0, %v698
    %v700 = vmul.f32 %v697, %v699
    %v701 = vadd.f32 %v697, %v700
    %vm702 = vweird.f32 %v695
    %vm703 = vweird.f32 %v697
    %vm704 = vmor %vm702, %vm703
    %v705 = vsel %vm704, %v697, %v701
    %v706 = vand.u32 2147483647, %v695
    %vm707 = vcmp.eq.f32.partialorder %v706, 8.507059e+37
    %v708 = vand.u32 %v695, 2147483648
    %v709 = vor.u32 1.1754944e-38, %v708
    %v710 = vsel %vm707, %v709, %v705
    %v711 = vmul.f32 1.0, %v710
    %v712 = vrcp.pop %v696
    %v713 = vmul.f32 %v696, %v712
    %v714 = vsub.f32 1.0, %v713
    %v715 = vmul.f32 %v712, %v714
    %v716 = vadd.f32 %v712, %v715
    %vm717 = vweird.f32 %v696
    %vm718 = vweird.f32 %v712
    %vm719 = vmor %vm717, %vm718
    %v720 = vsel %vm719, %v712, %v716
    %v721 = vand.u32 2147483647, %v696
    %vm722 = vcmp.eq.f32.partialorder %v721, 8.507059e+37
    %v723 = vand.u32 %v696, 2147483648
    %v724 = vor.u32 1.1754944e-38, %v723
    %v725 = vsel %vm722, %v724, %v720
    %v726 = vmul.f32 1.0, %v725
    %v727 = vtanh.pop %v688
    %v728 = vmul.f32 %v711, %v637
    %730 = vrot.lane.b32.xlu0 %v727, 64
    %v731 = vpop.permute.xlu0 %730
    %v733 = vmul.f32 %v711, %v731
    %735 = vrot.lane.b32.xlu0 %v733, 64
    %v736 = vpop.permute.xlu0 %735
    %v738 = vadd.f32 %v728, %v736
    %v739 = vtanh.pop %v738
    %741 = vrot.lane.b32.xlu0 %v739, 64
    %v742 = vpop.permute.xlu0 %741
    %v744 = vmul.f32 %v726, %v742
    %v746 = vsel %vm133, %v744, 0
    %748 = vmatpush.msra.mxu0 0.0
    %749 = vmatpush.msra.mxu0 0.0
    %750 = vmatpush.msra.mxu0 0.0
    %751 = vmatpush.msra.mxu0 0.0
    %752 = vmatpush.msra.mxu0 0.0
    %753 = vmatpush.msra.mxu0 0.0
    %754 = vmatpush.msra.mxu0 0.0
    %755 = vmatpush.msra.mxu0 0.0
    %756 = vmatpush.msra.mxu0 %v101
    %757 = vmatpush.msra.mxu0 %v99
    %758 = vmatpush.msra.mxu0 %v97
    %759 = vmatpush.msra.mxu0 %v95
    %760 = vmatpush.msra.mxu0 %v93
    %761 = vmatpush.msra.mxu0 %v91
    %762 = vmatpush.msra.mxu0 %v89
    %763 = vmatpush.msra.mxu0 %v87
    %764 = vmatmul.f32.gmra.mxu0 %v746
    %v765 = vpop.f32.mrf.mxu0
    %v766 = vadd.f32 0.0, %v765
    %767 = vdwg.mxu0
    %768 = vmatpush.msra.mxu0 0.0
    %769 = vmatpush.msra.mxu0 0.0
    %770 = vmatpush.msra.mxu0 0.0
    %771 = vmatpush.msra.mxu0 0.0
    %772 = vmatpush.msra.mxu0 0.0
    %773 = vmatpush.msra.mxu0 0.0
    %774 = vmatpush.msra.mxu0 0.0
    %775 = vmatpush.msra.mxu0 0.0
    %776 = vmatpush.msra.mxu0 %v102
    %777 = vmatpush.msra.mxu0 %v100
    %778 = vmatpush.msra.mxu0 %v98
    %779 = vmatpush.msra.mxu0 %v96
    %780 = vmatpush.msra.mxu0 %v94
    %781 = vmatpush.msra.mxu0 %v92
    %782 = vmatpush.msra.mxu0 %v90
    %783 = vmatpush.msra.mxu0 %v88
    %784 = vmatmul.f32.gmra.mxu0 %v746
    %v785 = vpop.f32.mrf.mxu0
    %v786 = vadd.f32 0.0, %v785
    %787 = vdwg.mxu0
    %v788 = vadd.f32 %v191, %v766
    %v789 = vadd.f32 %v232, %v786
    %v790 = vxor.u32 %v788, 2147483648
    %v791 = vxor.u32 %v789, 2147483648
    %v792 = vmul.f32 %v790, 1.442695
    %v793 = vpow.pop %v792
    %v794 = vmul.f32 %v791, 1.442695
    %v795 = vpow.pop %v794
    %v796 = vadd.f32 %v793, 1.0
    %v797 = vadd.f32 %v795, 1.0
    %v798 = vrcp.pop %v796
    %v799 = vmul.f32 %v796, %v798
    %v800 = vsub.f32 1.0, %v799
    %v801 = vmul.f32 %v798, %v800
    %v802 = vadd.f32 %v798, %v801
    %vm803 = vweird.f32 %v796
    %vm804 = vweird.f32 %v798
    %vm805 = vmor %vm803, %vm804
    %v806 = vsel %vm805, %v798, %v802
    %v807 = vand.u32 2147483647, %v796
    %vm808 = vcmp.eq.f32.partialorder %v807, 8.507059e+37
    %v809 = vand.u32 %v796, 2147483648
    %v810 = vor.u32 1.1754944e-38, %v809
    %v811 = vsel %vm808, %v810, %v806
    %v812 = vmul.f32 1.0, %v811
    %v813 = vrcp.pop %v797
    %v814 = vmul.f32 %v797, %v813
    %v815 = vsub.f32 1.0, %v814
    %v816 = vmul.f32 %v813, %v815
    %v817 = vadd.f32 %v813, %v816
    %vm818 = vweird.f32 %v797
    %vm819 = vweird.f32 %v813
    %vm820 = vmor %vm818, %vm819
    %v821 = vsel %vm820, %v813, %v817
    %v822 = vand.u32 2147483647, %v797
    %vm823 = vcmp.eq.f32.partialorder %v822, 8.507059e+37
    %v824 = vand.u32 %v797, 2147483648
    %v825 = vor.u32 1.1754944e-38, %v824
    %v826 = vsel %vm823, %v825, %v821
    %v827 = vmul.f32 1.0, %v826
    %v828 = vtanh.pop %v789
    %v829 = vmul.f32 %v812, %v738
    %831 = vrot.lane.b32.xlu0 %v828, 64
    %v832 = vpop.permute.xlu0 %831
    %v834 = vmul.f32 %v812, %v832
    %836 = vrot.lane.b32.xlu0 %v834, 64
    %v837 = vpop.permute.xlu0 %836
    %v839 = vadd.f32 %v829, %v837
    %v840 = vtanh.pop %v839
    %842 = vrot.lane.b32.xlu0 %v840, 64
    %v843 = vpop.permute.xlu0 %842
    %v845 = vmul.f32 %v827, %v843
    %v847 = vsel %vm133, %v845, 0
    %849 = vmatpush.msra.mxu0 0.0
    %850 = vmatpush.msra.mxu0 0.0
    %851 = vmatpush.msra.mxu0 0.0
    %852 = vmatpush.msra.mxu0 0.0
    %853 = vmatpush.msra.mxu0 0.0
    %854 = vmatpush.msra.mxu0 0.0
    %855 = vmatpush.msra.mxu0 0.0
    %856 = vmatpush.msra.mxu0 0.0
    %857 = vmatpush.msra.mxu0 %v101
    %858 = vmatpush.msra.mxu0 %v99
    %859 = vmatpush.msra.mxu0 %v97
    %860 = vmatpush.msra.mxu0 %v95
    %861 = vmatpush.msra.mxu0 %v93
    %862 = vmatpush.msra.mxu0 %v91
    %863 = vmatpush.msra.mxu0 %v89
    %864 = vmatpush.msra.mxu0 %v87
    %865 = vmatmul.f32.gmra.mxu0 %v847
    %v866 = vpop.f32.mrf.mxu0
    %v867 = vadd.f32 0.0, %v866
    %868 = vdwg.mxu0
    %869 = vmatpush.msra.mxu0 0.0
    %870 = vmatpush.msra.mxu0 0.0
    %871 = vmatpush.msra.mxu0 0.0
    %872 = vmatpush.msra.mxu0 0.0
    %873 = vmatpush.msra.mxu0 0.0
    %874 = vmatpush.msra.mxu0 0.0
    %875 = vmatpush.msra.mxu0 0.0
    %876 = vmatpush.msra.mxu0 0.0
    %877 = vmatpush.msra.mxu0 %v102
    %878 = vmatpush.msra.mxu0 %v100
    %879 = vmatpush.msra.mxu0 %v98
    %880 = vmatpush.msra.mxu0 %v96
    %881 = vmatpush.msra.mxu0 %v94
    %882 = vmatpush.msra.mxu0 %v92
    %883 = vmatpush.msra.mxu0 %v90
    %884 = vmatpush.msra.mxu0 %v88
    %885 = vmatmul.f32.gmra.mxu0 %v847
    %v886 = vpop.f32.mrf.mxu0
    %v887 = vadd.f32 0.0, %v886
    %888 = vdwg.mxu0
    %v889 = vadd.f32 %v194, %v867
    %v890 = vadd.f32 %v235, %v887
    %v891 = vxor.u32 %v889, 2147483648
    %v892 = vxor.u32 %v890, 2147483648
    %v893 = vmul.f32 %v891, 1.442695
    %v894 = vpow.pop %v893
    %v895 = vmul.f32 %v892, 1.442695
    %v896 = vpow.pop %v895
    %v897 = vadd.f32 %v894, 1.0
    %v898 = vadd.f32 %v896, 1.0
    %v899 = vrcp.pop %v897
    %v900 = vmul.f32 %v897, %v899
    %v901 = vsub.f32 1.0, %v900
    %v902 = vmul.f32 %v899, %v901
    %v903 = vadd.f32 %v899, %v902
    %vm904 = vweird.f32 %v897
    %vm905 = vweird.f32 %v899
    %vm906 = vmor %vm904, %vm905
    %v907 = vsel %vm906, %v899, %v903
    %v908 = vand.u32 2147483647, %v897
    %vm909 = vcmp.eq.f32.partialorder %v908, 8.507059e+37
    %v910 = vand.u32 %v897, 2147483648
    %v911 = vor.u32 1.1754944e-38, %v910
    %v912 = vsel %vm909, %v911, %v907
    %v913 = vmul.f32 1.0, %v912
    %v914 = vrcp.pop %v898
    %v915 = vmul.f32 %v898, %v914
    %v916 = vsub.f32 1.0, %v915
    %v917 = vmul.f32 %v914, %v916
    %v918 = vadd.f32 %v914, %v917
    %vm919 = vweird.f32 %v898
    %vm920 = vweird.f32 %v914
    %vm921 = vmor %vm919, %vm920
    %v922 = vsel %vm921, %v914, %v918
    %v923 = vand.u32 2147483647, %v898
    %vm924 = vcmp.eq.f32.partialorder %v923, 8.507059e+37
    %v925 = vand.u32 %v898, 2147483648
    %v926 = vor.u32 1.1754944e-38, %v925
    %v927 = vsel %vm924, %v926, %v922
    %v928 = vmul.f32 1.0, %v927
    %v929 = vtanh.pop %v890
    %v930 = vmul.f32 %v913, %v839
    %932 = vrot.lane.b32.xlu0 %v929, 64
    %v933 = vpop.permute.xlu0 %932
    %v935 = vmul.f32 %v913, %v933
    %937 = vrot.lane.b32.xlu0 %v935, 64
    %v938 = vpop.permute.xlu0 %937
    %v940 = vadd.f32 %v930, %v938
    %v941 = vtanh.pop %v940
    %943 = vrot.lane.b32.xlu0 %v941, 64
    %v944 = vpop.permute.xlu0 %943
    %v946 = vmul.f32 %v928, %v944
    %v948 = vsel %vm133, %v946, 0
    %950 = vmatpush.msra.mxu0 0.0
    %951 = vmatpush.msra.mxu0 0.0
    %952 = vmatpush.msra.mxu0 0.0
    %953 = vmatpush.msra.mxu0 0.0
    %954 = vmatpush.msra.mxu0 0.0
    %955 = vmatpush.msra.mxu0 0.0
    %956 = vmatpush.msra.mxu0 0.0
    %957 = vmatpush.msra.mxu0 0.0
    %958 = vmatpush.msra.mxu0 %v101
    %959 = vmatpush.msra.mxu0 %v99
    %960 = vmatpush.msra.mxu0 %v97
    %961 = vmatpush.msra.mxu0 %v95
    %962 = vmatpush.msra.mxu0 %v93
    %963 = vmatpush.msra.mxu0 %v91
    %964 = vmatpush.msra.mxu0 %v89
    %965 = vmatpush.msra.mxu0 %v87
    %966 = vmatmul.f32.gmra.mxu0 %v948
    %v967 = vpop.f32.mrf.mxu0
    %v968 = vadd.f32 0.0, %v967
    %969 = vdwg.mxu0
    %970 = vmatpush.msra.mxu0 0.0
    %971 = vmatpush.msra.mxu0 0.0
    %972 = vmatpush.msra.mxu0 0.0
    %973 = vmatpush.msra.mxu0 0.0
    %974 = vmatpush.msra.mxu0 0.0
    %975 = vmatpush.msra.mxu0 0.0
    %976 = vmatpush.msra.mxu0 0.0
    %977 = vmatpush.msra.mxu0 0.0
    %978 = vmatpush.msra.mxu0 %v102
    %979 = vmatpush.msra.mxu0 %v100
    %980 = vmatpush.msra.mxu0 %v98
    %981 = vmatpush.msra.mxu0 %v96
    %982 = vmatpush.msra.mxu0 %v94
    %983 = vmatpush.msra.mxu0 %v92
    %984 = vmatpush.msra.mxu0 %v90
    %985 = vmatpush.msra.mxu0 %v88
    %986 = vmatmul.f32.gmra.mxu0 %v948
    %v987 = vpop.f32.mrf.mxu0
    %v988 = vadd.f32 0.0, %v987
    %989 = vdwg.mxu0
    %v990 = vadd.f32 %v197, %v968
    %v991 = vadd.f32 %v238, %v988
    %v992 = vxor.u32 %v990, 2147483648
    %v993 = vxor.u32 %v991, 2147483648
    %v994 = vmul.f32 %v992, 1.442695
    %v995 = vpow.pop %v994
    %v996 = vmul.f32 %v993, 1.442695
    %v997 = vpow.pop %v996
    %v998 = vadd.f32 %v995, 1.0
    %v999 = vadd.f32 %v997, 1.0
    %v1000 = vrcp.pop %v998
    %v1001 = vmul.f32 %v998, %v1000
    %v1002 = vsub.f32 1.0, %v1001
    %v1003 = vmul.f32 %v1000, %v1002
    %v1004 = vadd.f32 %v1000, %v1003
    %vm1005 = vweird.f32 %v998
    %vm1006 = vweird.f32 %v1000
    %vm1007 = vmor %vm1005, %vm1006
    %v1008 = vsel %vm1007, %v1000, %v1004
    %v1009 = vand.u32 2147483647, %v998
    %vm1010 = vcmp.eq.f32.partialorder %v1009, 8.507059e+37
    %v1011 = vand.u32 %v998, 2147483648
    %v1012 = vor.u32 1.1754944e-38, %v1011
    %v1013 = vsel %vm1010, %v1012, %v1008
    %v1014 = vmul.f32 1.0, %v1013
    %v1015 = vrcp.pop %v999
    %v1016 = vmul.f32 %v999, %v1015
    %v1017 = vsub.f32 1.0, %v1016
    %v1018 = vmul.f32 %v1015, %v1017
    %v1019 = vadd.f32 %v1015, %v1018
    %vm1020 = vweird.f32 %v999
    %vm1021 = vweird.f32 %v1015
    %vm1022 = vmor %vm1020, %vm1021
    %v1023 = vsel %vm1022, %v1015, %v1019
    %v1024 = vand.u32 2147483647, %v999
    %vm1025 = vcmp.eq.f32.partialorder %v1024, 8.507059e+37
    %v1026 = vand.u32 %v999, 2147483648
    %v1027 = vor.u32 1.1754944e-38, %v1026
    %v1028 = vsel %vm1025, %v1027, %v1023
    %v1029 = vmul.f32 1.0, %v1028
    %v1030 = vtanh.pop %v991
    %v1031 = vmul.f32 %v1014, %v940
    %1033 = vrot.lane.b32.xlu0 %v1030, 64
    %v1034 = vpop.permute.xlu0 %1033
    %v1036 = vmul.f32 %v1014, %v1034
    %1038 = vrot.lane.b32.xlu0 %v1036, 64
    %v1039 = vpop.permute.xlu0 %1038
    %v1041 = vadd.f32 %v1031, %v1039
    %v1042 = vtanh.pop %v1041
    %1044 = vrot.lane.b32.xlu0 %v1042, 64
    %v1045 = vpop.permute.xlu0 %1044
    %v1047 = vmul.f32 %v1029, %v1045
    %v1048 = vld [vmem:[#allocation8] sm:$0xff]
    %v1049 = vld [vmem:[#allocation8 + $0x8] sm:$0xff]
    %v1050 = vld [vmem:[#allocation8 + $0x10] sm:$0xff]
    %v1051 = vld [vmem:[#allocation8 + $0x18] sm:$0xff]
    %v1052 = vld [vmem:[#allocation8 + $0x20] sm:$0xff]
    %v1053 = vld [vmem:[#allocation8 + $0x28] sm:$0xff]
    %v1054 = vld [vmem:[#allocation8 + $0x30] sm:$0xff]
    %v1055 = vld [vmem:[#allocation8 + $0x38] sm:$0xff]
    %v1056 = vld [vmem:[%s5] sm:$0x1]
    %v1058 = vperm.slane %v1056, 0
    %v1061 = vsel %vm133, %v1047, 0
    %1063 = vmatpush.msra.mxu0 0.0
    %1064 = vmatpush.msra.mxu0 0.0
    %1065 = vmatpush.msra.mxu0 0.0
    %1066 = vmatpush.msra.mxu0 0.0
    %1067 = vmatpush.msra.mxu0 0.0
    %1068 = vmatpush.msra.mxu0 0.0
    %1069 = vmatpush.msra.mxu0 0.0
    %1070 = vmatpush.msra.mxu0 0.0
    %1071 = vmatpush.msra.mxu0 %v1055
    %1072 = vmatpush.msra.mxu0 %v1054
    %1073 = vmatpush.msra.mxu0 %v1053
    %1074 = vmatpush.msra.mxu0 %v1052
    %1075 = vmatpush.msra.mxu0 %v1051
    %1076 = vmatpush.msra.mxu0 %v1050
    %1077 = vmatpush.msra.mxu0 %v1049
    %1078 = vmatpush.msra.mxu0 %v1048
    %1079 = vmatmul.f32.gmra.mxu0 %v1061
    %v1080 = vpop.f32.mrf.mxu0
    %v1081 = vadd.f32 %v1058, %v1080
    %1082 = vdwg.mxu0
    %1083 = vst [vmem:[#allocation10] sm:$0xff] %v1081
    // Predicated region
    $region42: #{tpu_custom_call.1} parent=1 // pred_check
      _
    $region43: #{tpu_custom_call.1} parent=1 // pred_check_branch
      %1085 = sbr.rel (0) target = $region45
    $region44: #{tpu_custom_call.1} parent=1 // pred_region
      %1087 = vsyncadd [#allocation4], 0
      %s1089 = sshll.u32 [#allocation10], 4
      %s1090 = int_to_ptr.vmem [resolvable:$true] %s1089
      %s1091 = sshll.u32 %s6, 4
      %s1092 = int_to_ptr.hbm [resolvable:$true] %s1091
      %1094 = dma.vmem_to_hbm [thread:$0]  %s1090, 128, %s1092, [#allocation4]
    $region45: #{tpu_custom_call.1} parent=1 // pred_fallthru
      _
    // Predicated region
    $region46: #{tpu_custom_call.1} parent=1 // pred_check
      _
    $region47: #{tpu_custom_call.1} parent=1 // pred_check_branch
      %1096 = sbr.rel (0) target = $region49
    $region48: #{tpu_custom_call.1} parent=1 // pred_region
      %1098 = dma.done [#allocation4], 128
    $region49: #{tpu_custom_call.1} parent=1 // pred_fallthru
      _
    %1099 = vsyncpa [#allocation3], 1
    %1100 = vsyncpa [#allocation6], 1
    %1101 = vsyncpa [#allocation9], 1
    %1102 = vsyncpa [#allocation4], 1

</llo_original>
